<compile_context>
chip_gen: v5e
topology: v5e:2x2
jax: 0.10.0
libtpu: 0.0.40
codegen_flags: <defaults>
</compile_context>

<pallas_src>
import jax
import jax.numpy as jnp
from jax.experimental import pallas as pl
from jax.experimental.pallas import tpu as pltpu

KSIZE = 15
STRIDE = 2
PAD = 7
BN_EPS = 1e-5


def _round_up(v, m):
    return (v + m - 1) // m * m


def _encoder_block_kernel(
    xe_ref,      # (1, C_in, TL)      even-phase input tile   xe[j] = x[2j-7]
    xo_ref,      # (1, C_in, TL)      odd-phase  input tile   xo[j] = x[2j-6]
    he_ref,      # (1, 1, C_in, 8)    even-phase halo (next 8 columns)
    ho_ref,      # (1, 1, C_in, 8)    odd-phase  halo
    w15_ref,     # (K, C_out, C_in)   BN1-folded conv15 weights
    w1_ref,      # (C_out, C_in)      BN2-folded 1x1 skip weights
    s1_ref,      # (C_out, 1)         folded bias+BN1 shift
    s2_ref,      # (C_out, 1)         folded bias+BN2 shift
    alpha_ref,   # (1,) in SMEM       PReLU slope
    out_ref,     # (1, C_out, TL)
):
    TL = xe_ref.shape[2]

    # Windows with the halo appended: lanes [tile_start, tile_start + TL + 8).
    win_e = jnp.concatenate([xe_ref[0], he_ref[0, 0]], axis=1)   # (C_in, TL+8)
    win_o = jnp.concatenate([xo_ref[0], ho_ref[0, 0]], axis=1)   # (C_in, TL+8)

    # Main branch: conv15 as 15 accumulated (C_out,C_in)@(C_in,TL) matmuls.
    #   out[:, l] = sum_k W[k] @ x_pad[2l+k];   k=2m -> xe[l+m], k=2m+1 -> xo[l+m]
    acc = jnp.dot(w15_ref[0], win_e[:, 0:TL], preferred_element_type=jnp.float32)
    for k in range(1, KSIZE):
        m = k // 2
        xk = win_e[:, m:m + TL] if (k % 2 == 0) else win_o[:, m:m + TL]
        acc = acc + jnp.dot(w15_ref[k], xk, preferred_element_type=jnp.float32)

    alpha = alpha_ref[0]
    main = acc + s1_ref[...]                               # (C_out, TL)
    main = jnp.where(main > 0, main, alpha * main)         # PReLU

    # Skip branch: 1x1 stride-2 conv input x[2l] == odd-phase tap m=3 (k=7).
    skip_in = win_o[:, 3:3 + TL]                           # (C_in, TL)
    skip = jnp.dot(w1_ref[...], skip_in, preferred_element_type=jnp.float32) + s2_ref[...]

    out_ref[0] = (main + skip).astype(out_ref.dtype)


def encoder_block_pallas(x, params, tl=512):
    """x: (N, C_in, L_in) float32 (PyTorch NCL).  Returns (N, C_out, L_out) NCL."""
    N, C_in, L_in = x.shape
    C_out = params["w15"].shape[0]
    L_out = (L_in - 1) // STRIDE + 1

    # Lane tile must be a multiple of 128 (lane dim of input/output blocks).
    TL = _round_up(min(tl, _round_up(L_out, 128)), 128)
    num_tiles = pl.cdiv(L_out, TL)
    L_out_pad = num_tiles * TL
    L_phase = L_out_pad + 8          # phases carry an 8-column tail for the last halo

    # ---- glue: even/odd phase split of the (implicitly zero-padded) input ----
    # x_pad[t] = x[t-7];  xe[j] = x_pad[2j] = x[2j-7];  xo[j] = x_pad[2j+1] = x[2j-6]
    x_odd = x[:, :, 1::2]    # feeds xe starting at j=4
    x_even = x[:, :, 0::2]   # feeds xo starting at j=3
    xe_full = jnp.pad(x_odd, ((0, 0), (0, 0), (4, L_phase - 4 - x_odd.shape[2])))
    xo_full = jnp.pad(x_even, ((0, 0), (0, 0), (3, L_phase - 3 - x_even.shape[2])))

    # Per-tile halo: the 8 columns just past each tile ( (t+1)*TL .. (t+1)*TL+7 ).
    halo_idx = (jnp.arange(num_tiles) + 1)[:, None] * TL + jnp.arange(8)[None, :]
    he = jnp.transpose(xe_full[:, :, halo_idx], (0, 2, 1, 3))   # (N, T, C_in, 8)
    ho = jnp.transpose(xo_full[:, :, halo_idx], (0, 2, 1, 3))   # (N, T, C_in, 8)

    # ---- fold eval-mode BN + conv bias into weights / shifts ----
    s1 = params["bn1_gamma"] / jnp.sqrt(params["bn1_var"] + BN_EPS)
    w15f = jnp.transpose(params["w15"] * s1[:, None, None], (2, 0, 1))        # (K, C_out, C_in)
    shift1 = ((params["b15"] - params["bn1_mean"]) * s1 + params["bn1_beta"]).reshape(C_out, 1)

    s2 = params["bn2_gamma"] / jnp.sqrt(params["bn2_var"] + BN_EPS)
    w1f = params["w1"][:, :, 0] * s2[:, None]                                 # (C_out, C_in)
    shift2 = ((params["b1"] - params["bn2_mean"]) * s2 + params["bn2_beta"]).reshape(C_out, 1)

    alpha = params["prelu_alpha"].reshape(1).astype(jnp.float32)

    flops = 2 * N * L_out_pad * C_in * C_out * (KSIZE + 1)
    bytes_accessed = 4 * (xe_full.size + xo_full.size + he.size + ho.size
                          + w15f.size + w1f.size + N * C_out * L_out_pad)

    out = pl.pallas_call(
        _encoder_block_kernel,
        out_shape=jax.ShapeDtypeStruct((N, C_out, L_out_pad), jnp.float32),
        grid=(N, num_tiles),
        in_specs=[
            pl.BlockSpec((1, C_in, TL), lambda n, t: (n, 0, t)),
            pl.BlockSpec((1, C_in, TL), lambda n, t: (n, 0, t)),
            pl.BlockSpec((1, 1, C_in, 8), lambda n, t: (n, t, 0, 0)),
            pl.BlockSpec((1, 1, C_in, 8), lambda n, t: (n, t, 0, 0)),
            pl.BlockSpec((KSIZE, C_out, C_in), lambda n, t: (0, 0, 0)),
            pl.BlockSpec((C_out, C_in), lambda n, t: (0, 0)),
            pl.BlockSpec((C_out, 1), lambda n, t: (0, 0)),
            pl.BlockSpec((C_out, 1), lambda n, t: (0, 0)),
            pl.BlockSpec(memory_space=pltpu.MemorySpace.SMEM),
        ],
        out_specs=pl.BlockSpec((1, C_out, TL), lambda n, t: (n, 0, t)),
        compiler_params=pltpu.CompilerParams(
            dimension_semantics=("parallel", "parallel"),
            vmem_limit_bytes=48 * 1024 * 1024,
        ),
        cost_estimate=pl.CostEstimate(
            flops=flops, transcendentals=0, bytes_accessed=bytes_accessed),
    )(xe_full, xo_full, he, ho, w15f, w1f, shift1, shift2, alpha)

    return out[:, :, :L_out]


def encoder_block_reference(x, params):
    """Pure-JAX reference of the PyTorch forward (eval-mode BN)."""
    dn = ("NCH", "OIH", "NCH")
    y = jax.lax.conv_general_dilated(x, params["w15"], (STRIDE,), ((PAD, PAD),),
                                     dimension_numbers=dn)
    y = y + params["b15"][None, :, None]
    s1 = params["bn1_gamma"] / jnp.sqrt(params["bn1_var"] + BN_EPS)
    y = (y - params["bn1_mean"][None, :, None]) * s1[None, :, None] + params["bn1_beta"][None, :, None]
    a = params["prelu_alpha"][0]
    y = jnp.where(y > 0, y, a * y)

    s = jax.lax.conv_general_dilated(x, params["w1"], (STRIDE,), ((0, 0),),
                                     dimension_numbers=dn)
    s = s + params["b1"][None, :, None]
    s2 = params["bn2_gamma"] / jnp.sqrt(params["bn2_var"] + BN_EPS)
    s = (s - params["bn2_mean"][None, :, None]) * s2[None, :, None] + params["bn2_beta"][None, :, None]
    return y + s


def init_params(key, c_in, c_out):
    ks = jax.random.split(key, 10)
    return {
        "w15": 0.1 * jax.random.normal(ks[0], (c_out, c_in, KSIZE), jnp.float32),
        "b15": 0.1 * jax.random.normal(ks[1], (c_out,), jnp.float32),
        "w1": 0.1 * jax.random.normal(ks[2], (c_out, c_in, 1), jnp.float32),
        "b1": 0.1 * jax.random.normal(ks[3], (c_out,), jnp.float32),
        "bn1_gamma": 1.0 + 0.1 * jax.random.normal(ks[4], (c_out,), jnp.float32),
        "bn1_beta": 0.1 * jax.random.normal(ks[5], (c_out,), jnp.float32),
        "bn1_mean": 0.05 * jax.random.normal(ks[6], (c_out,), jnp.float32),
        "bn1_var": jnp.abs(1.0 + 0.1 * jax.random.normal(ks[7], (c_out,), jnp.float32)),
        "bn2_gamma": 1.0 + 0.1 * jax.random.normal(ks[8], (c_out,), jnp.float32),
        "bn2_beta": 0.1 * jax.random.normal(ks[9], (c_out,), jnp.float32),
        "bn2_mean": jnp.zeros((c_out,), jnp.float32),
        "bn2_var": jnp.ones((c_out,), jnp.float32),
        "prelu_alpha": jnp.full((1,), 0.25, jnp.float32),  # PyTorch PReLU default
    }


if __name__ == "__main__":
    key = jax.random.PRNGKey(0)
    kx, kp = jax.random.split(key)

    N, C_in, C_out, L_in = 2, 4, 8, 32
    x = jax.random.normal(kx, (N, C_in, L_in), jnp.float32)
    params = init_params(kp, C_in, C_out)

    out = jax.block_until_ready(encoder_block_pallas(x, params))
    ref = jax.block_until_ready(encoder_block_reference(x, params))

    assert out.shape == (N, C_out, (L_in - 1) // 2 + 1), out.shape
    assert jnp.allclose(out, ref, atol=1e-4, rtol=1e-4), float(jnp.max(jnp.abs(out - ref)))
    print("KERNEL_OK")
</pallas_src>

<mosaic_0001>
module attributes {stable_mosaic.version = 11 : i64} {
  func.func @_encoder_block_kernel(%arg0: i32, %arg1: i32, %arg2: memref<1x4x128xf32, #tpu.memory_space<vmem>>, %arg3: memref<1x4x128xf32, #tpu.memory_space<vmem>>, %arg4: memref<1x1x4x8xf32, #tpu.memory_space<vmem>>, %arg5: memref<1x1x4x8xf32, #tpu.memory_space<vmem>>, %arg6: memref<15x8x4xf32, #tpu.memory_space<vmem>>, %arg7: memref<8x4xf32, #tpu.memory_space<vmem>>, %arg8: memref<8x1xf32, #tpu.memory_space<vmem>>, %arg9: memref<8x1xf32, #tpu.memory_space<vmem>>, %arg10: memref<1xf32, #tpu.memory_space<smem>>, %arg11: memref<1x8x128xf32, #tpu.memory_space<vmem>>) attributes {dimension_semantics = [#tpu.dimension_semantics<parallel>, #tpu.dimension_semantics<parallel>], iteration_bounds = array<i64: 2, 1>, scalar_prefetch = 0 : i64, scratch_operands = 0 : i64, tpu.core_type = #tpu.core_type<tc>, window_params = [{transform_indices = @transform_0, window_bounds = array<i64: 1, 4, 128>}, {transform_indices = @transform_1, window_bounds = array<i64: 1, 4, 128>}, {transform_indices = @transform_2, window_bounds = array<i64: 1, 1, 4, 8>}, {transform_indices = @transform_3, window_bounds = array<i64: 1, 1, 4, 8>}, {pipeline_mode = #tpu.pipeline_mode<synchronous>, transform_indices = @transform_4, window_bounds = array<i64: 15, 8, 4>}, {pipeline_mode = #tpu.pipeline_mode<synchronous>, transform_indices = @transform_5, window_bounds = array<i64: 8, 4>}, {pipeline_mode = #tpu.pipeline_mode<synchronous>, transform_indices = @transform_6, window_bounds = array<i64: 8, 1>}, {pipeline_mode = #tpu.pipeline_mode<synchronous>, transform_indices = @transform_7, window_bounds = array<i64: 8, 1>}, {transform_indices = @transform_8, window_bounds = array<i64: 1>}, {transform_indices = @transform_9, window_bounds = array<i64: 1, 8, 128>}]} {
    %c0 = arith.constant 0 : index
    %c0_0 = arith.constant 0 : index
    %c0_1 = arith.constant 0 : index
    %0 = vector.load %arg2[%c0, %c0_0, %c0_1] : memref<1x4x128xf32, #tpu.memory_space<vmem>>, vector<1x4x128xf32>
    %1 = vector.shape_cast %0 : vector<1x4x128xf32> to vector<4x128xf32>
    %c0_2 = arith.constant 0 : index
    %c0_3 = arith.constant 0 : index
    %c0_4 = arith.constant 0 : index
    %c0_5 = arith.constant 0 : index
    %2 = vector.load %arg4[%c0_2, %c0_3, %c0_4, %c0_5] : memref<1x1x4x8xf32, #tpu.memory_space<vmem>>, vector<1x1x4x8xf32>
    %3 = vector.shape_cast %2 : vector<1x1x4x8xf32> to vector<4x8xf32>
    %4 = tpu.concatenate %1, %3 in 1 : vector<4x128xf32>, vector<4x8xf32> -> vector<4x136xf32>
    %c0_6 = arith.constant 0 : index
    %c0_7 = arith.constant 0 : index
    %c0_8 = arith.constant 0 : index
    %5 = vector.load %arg3[%c0_6, %c0_7, %c0_8] : memref<1x4x128xf32, #tpu.memory_space<vmem>>, vector<1x4x128xf32>
    %6 = vector.shape_cast %5 : vector<1x4x128xf32> to vector<4x128xf32>
    %c0_9 = arith.constant 0 : index
    %c0_10 = arith.constant 0 : index
    %c0_11 = arith.constant 0 : index
    %c0_12 = arith.constant 0 : index
    %7 = vector.load %arg5[%c0_9, %c0_10, %c0_11, %c0_12] : memref<1x1x4x8xf32, #tpu.memory_space<vmem>>, vector<1x1x4x8xf32>
    %8 = vector.shape_cast %7 : vector<1x1x4x8xf32> to vector<4x8xf32>
    %9 = tpu.concatenate %6, %8 in 1 : vector<4x128xf32>, vector<4x8xf32> -> vector<4x136xf32>
    %c0_13 = arith.constant 0 : index
    %c0_14 = arith.constant 0 : index
    %c0_15 = arith.constant 0 : index
    %10 = vector.load %arg6[%c0_13, %c0_14, %c0_15] : memref<15x8x4xf32, #tpu.memory_space<vmem>>, vector<1x8x4xf32>
    %11 = vector.shape_cast %10 : vector<1x8x4xf32> to vector<8x4xf32>
    %12 = vector.extract_strided_slice %4 {offsets = [0, 0], sizes = [4, 128], strides = [1, 1]} : vector<4x136xf32> to vector<4x128xf32>
    %cst = arith.constant dense<0.000000e+00> : vector<8x128xf32>
    %13 = tpu.matmul %11, %12, %cst {dimension_numbers = #tpu.dot_dimension_numbers<[1], [0], [0], [1], [0, 0, 1, 1], [], []>} : vector<8x4xf32>, vector<4x128xf32>, vector<8x128xf32> -> vector<8x128xf32>
    %14 = vector.extract_strided_slice %9 {offsets = [0, 0], sizes = [4, 128], strides = [1, 1]} : vector<4x136xf32> to vector<4x128xf32>
    %c1 = arith.constant 1 : index
    %c0_16 = arith.constant 0 : index
    %c0_17 = arith.constant 0 : index
    %15 = vector.load %arg6[%c1, %c0_16, %c0_17] : memref<15x8x4xf32, #tpu.memory_space<vmem>>, vector<1x8x4xf32>
    %16 = vector.shape_cast %15 : vector<1x8x4xf32> to vector<8x4xf32>
    %cst_18 = arith.constant dense<0.000000e+00> : vector<8x128xf32>
    %17 = tpu.matmul %16, %14, %cst_18 {dimension_numbers = #tpu.dot_dimension_numbers<[1], [0], [0], [1], [0, 0, 1, 1], [], []>} : vector<8x4xf32>, vector<4x128xf32>, vector<8x128xf32> -> vector<8x128xf32>
    %18 = arith.addf %13, %17 : vector<8x128xf32>
    %19 = vector.extract_strided_slice %4 {offsets = [0, 1], sizes = [4, 128], strides = [1, 1]} : vector<4x136xf32> to vector<4x128xf32>
    %c2 = arith.constant 2 : index
    %c0_19 = arith.constant 0 : index
    %c0_20 = arith.constant 0 : index
    %20 = vector.load %arg6[%c2, %c0_19, %c0_20] : memref<15x8x4xf32, #tpu.memory_space<vmem>>, vector<1x8x4xf32>
    %21 = vector.shape_cast %20 : vector<1x8x4xf32> to vector<8x4xf32>
    %cst_21 = arith.constant dense<0.000000e+00> : vector<8x128xf32>
    %22 = tpu.matmul %21, %19, %cst_21 {dimension_numbers = #tpu.dot_dimension_numbers<[1], [0], [0], [1], [0, 0, 1, 1], [], []>} : vector<8x4xf32>, vector<4x128xf32>, vector<8x128xf32> -> vector<8x128xf32>
    %23 = arith.addf %18, %22 : vector<8x128xf32>
    %24 = vector.extract_strided_slice %9 {offsets = [0, 1], sizes = [4, 128], strides = [1, 1]} : vector<4x136xf32> to vector<4x128xf32>
    %c3 = arith.constant 3 : index
    %c0_22 = arith.constant 0 : index
    %c0_23 = arith.constant 0 : index
    %25 = vector.load %arg6[%c3, %c0_22, %c0_23] : memref<15x8x4xf32, #tpu.memory_space<vmem>>, vector<1x8x4xf32>
    %26 = vector.shape_cast %25 : vector<1x8x4xf32> to vector<8x4xf32>
    %cst_24 = arith.constant dense<0.000000e+00> : vector<8x128xf32>
    %27 = tpu.matmul %26, %24, %cst_24 {dimension_numbers = #tpu.dot_dimension_numbers<[1], [0], [0], [1], [0, 0, 1, 1], [], []>} : vector<8x4xf32>, vector<4x128xf32>, vector<8x128xf32> -> vector<8x128xf32>
    %28 = arith.addf %23, %27 : vector<8x128xf32>
    %29 = vector.extract_strided_slice %4 {offsets = [0, 2], sizes = [4, 128], strides = [1, 1]} : vector<4x136xf32> to vector<4x128xf32>
    %c4 = arith.constant 4 : index
    %c0_25 = arith.constant 0 : index
    %c0_26 = arith.constant 0 : index
    %30 = vector.load %arg6[%c4, %c0_25, %c0_26] : memref<15x8x4xf32, #tpu.memory_space<vmem>>, vector<1x8x4xf32>
    %31 = vector.shape_cast %30 : vector<1x8x4xf32> to vector<8x4xf32>
    %cst_27 = arith.constant dense<0.000000e+00> : vector<8x128xf32>
    %32 = tpu.matmul %31, %29, %cst_27 {dimension_numbers = #tpu.dot_dimension_numbers<[1], [0], [0], [1], [0, 0, 1, 1], [], []>} : vector<8x4xf32>, vector<4x128xf32>, vector<8x128xf32> -> vector<8x128xf32>
    %33 = arith.addf %28, %32 : vector<8x128xf32>
    %34 = vector.extract_strided_slice %9 {offsets = [0, 2], sizes = [4, 128], strides = [1, 1]} : vector<4x136xf32> to vector<4x128xf32>
    %c5 = arith.constant 5 : index
    %c0_28 = arith.constant 0 : index
    %c0_29 = arith.constant 0 : index
    %35 = vector.load %arg6[%c5, %c0_28, %c0_29] : memref<15x8x4xf32, #tpu.memory_space<vmem>>, vector<1x8x4xf32>
    %36 = vector.shape_cast %35 : vector<1x8x4xf32> to vector<8x4xf32>
    %cst_30 = arith.constant dense<0.000000e+00> : vector<8x128xf32>
    %37 = tpu.matmul %36, %34, %cst_30 {dimension_numbers = #tpu.dot_dimension_numbers<[1], [0], [0], [1], [0, 0, 1, 1], [], []>} : vector<8x4xf32>, vector<4x128xf32>, vector<8x128xf32> -> vector<8x128xf32>
    %38 = arith.addf %33, %37 : vector<8x128xf32>
    %39 = vector.extract_strided_slice %4 {offsets = [0, 3], sizes = [4, 128], strides = [1, 1]} : vector<4x136xf32> to vector<4x128xf32>
    %c6 = arith.constant 6 : index
    %c0_31 = arith.constant 0 : index
    %c0_32 = arith.constant 0 : index
    %40 = vector.load %arg6[%c6, %c0_31, %c0_32] : memref<15x8x4xf32, #tpu.memory_space<vmem>>, vector<1x8x4xf32>
    %41 = vector.shape_cast %40 : vector<1x8x4xf32> to vector<8x4xf32>
    %cst_33 = arith.constant dense<0.000000e+00> : vector<8x128xf32>
    %42 = tpu.matmul %41, %39, %cst_33 {dimension_numbers = #tpu.dot_dimension_numbers<[1], [0], [0], [1], [0, 0, 1, 1], [], []>} : vector<8x4xf32>, vector<4x128xf32>, vector<8x128xf32> -> vector<8x128xf32>
    %43 = arith.addf %38, %42 : vector<8x128xf32>
    %44 = vector.extract_strided_slice %9 {offsets = [0, 3], sizes = [4, 128], strides = [1, 1]} : vector<4x136xf32> to vector<4x128xf32>
    %c7 = arith.constant 7 : index
    %c0_34 = arith.constant 0 : index
    %c0_35 = arith.constant 0 : index
    %45 = vector.load %arg6[%c7, %c0_34, %c0_35] : memref<15x8x4xf32, #tpu.memory_space<vmem>>, vector<1x8x4xf32>
    %46 = vector.shape_cast %45 : vector<1x8x4xf32> to vector<8x4xf32>
    %cst_36 = arith.constant dense<0.000000e+00> : vector<8x128xf32>
    %47 = tpu.matmul %46, %44, %cst_36 {dimension_numbers = #tpu.dot_dimension_numbers<[1], [0], [0], [1], [0, 0, 1, 1], [], []>} : vector<8x4xf32>, vector<4x128xf32>, vector<8x128xf32> -> vector<8x128xf32>
    %48 = arith.addf %43, %47 : vector<8x128xf32>
    %49 = vector.extract_strided_slice %4 {offsets = [0, 4], sizes = [4, 128], strides = [1, 1]} : vector<4x136xf32> to vector<4x128xf32>
    %c8 = arith.constant 8 : index
    %c0_37 = arith.constant 0 : index
    %c0_38 = arith.constant 0 : index
    %50 = vector.load %arg6[%c8, %c0_37, %c0_38] : memref<15x8x4xf32, #tpu.memory_space<vmem>>, vector<1x8x4xf32>
    %51 = vector.shape_cast %50 : vector<1x8x4xf32> to vector<8x4xf32>
    %cst_39 = arith.constant dense<0.000000e+00> : vector<8x128xf32>
    %52 = tpu.matmul %51, %49, %cst_39 {dimension_numbers = #tpu.dot_dimension_numbers<[1], [0], [0], [1], [0, 0, 1, 1], [], []>} : vector<8x4xf32>, vector<4x128xf32>, vector<8x128xf32> -> vector<8x128xf32>
    %53 = arith.addf %48, %52 : vector<8x128xf32>
    %54 = vector.extract_strided_slice %9 {offsets = [0, 4], sizes = [4, 128], strides = [1, 1]} : vector<4x136xf32> to vector<4x128xf32>
    %c9 = arith.constant 9 : index
    %c0_40 = arith.constant 0 : index
    %c0_41 = arith.constant 0 : index
    %55 = vector.load %arg6[%c9, %c0_40, %c0_41] : memref<15x8x4xf32, #tpu.memory_space<vmem>>, vector<1x8x4xf32>
    %56 = vector.shape_cast %55 : vector<1x8x4xf32> to vector<8x4xf32>
    %cst_42 = arith.constant dense<0.000000e+00> : vector<8x128xf32>
    %57 = tpu.matmul %56, %54, %cst_42 {dimension_numbers = #tpu.dot_dimension_numbers<[1], [0], [0], [1], [0, 0, 1, 1], [], []>} : vector<8x4xf32>, vector<4x128xf32>, vector<8x128xf32> -> vector<8x128xf32>
    %58 = arith.addf %53, %57 : vector<8x128xf32>
    %59 = vector.extract_strided_slice %4 {offsets = [0, 5], sizes = [4, 128], strides = [1, 1]} : vector<4x136xf32> to vector<4x128xf32>
    %c10 = arith.constant 10 : index
    %c0_43 = arith.constant 0 : index
    %c0_44 = arith.constant 0 : index
    %60 = vector.load %arg6[%c10, %c0_43, %c0_44] : memref<15x8x4xf32, #tpu.memory_space<vmem>>, vector<1x8x4xf32>
    %61 = vector.shape_cast %60 : vector<1x8x4xf32> to vector<8x4xf32>
    %cst_45 = arith.constant dense<0.000000e+00> : vector<8x128xf32>
    %62 = tpu.matmul %61, %59, %cst_45 {dimension_numbers = #tpu.dot_dimension_numbers<[1], [0], [0], [1], [0, 0, 1, 1], [], []>} : vector<8x4xf32>, vector<4x128xf32>, vector<8x128xf32> -> vector<8x128xf32>
    %63 = arith.addf %58, %62 : vector<8x128xf32>
    %64 = vector.extract_strided_slice %9 {offsets = [0, 5], sizes = [4, 128], strides = [1, 1]} : vector<4x136xf32> to vector<4x128xf32>
    %c11 = arith.constant 11 : index
    %c0_46 = arith.constant 0 : index
    %c0_47 = arith.constant 0 : index
    %65 = vector.load %arg6[%c11, %c0_46, %c0_47] : memref<15x8x4xf32, #tpu.memory_space<vmem>>, vector<1x8x4xf32>
    %66 = vector.shape_cast %65 : vector<1x8x4xf32> to vector<8x4xf32>
    %cst_48 = arith.constant dense<0.000000e+00> : vector<8x128xf32>
    %67 = tpu.matmul %66, %64, %cst_48 {dimension_numbers = #tpu.dot_dimension_numbers<[1], [0], [0], [1], [0, 0, 1, 1], [], []>} : vector<8x4xf32>, vector<4x128xf32>, vector<8x128xf32> -> vector<8x128xf32>
    %68 = arith.addf %63, %67 : vector<8x128xf32>
    %69 = vector.extract_strided_slice %4 {offsets = [0, 6], sizes = [4, 128], strides = [1, 1]} : vector<4x136xf32> to vector<4x128xf32>
    %c12 = arith.constant 12 : index
    %c0_49 = arith.constant 0 : index
    %c0_50 = arith.constant 0 : index
    %70 = vector.load %arg6[%c12, %c0_49, %c0_50] : memref<15x8x4xf32, #tpu.memory_space<vmem>>, vector<1x8x4xf32>
    %71 = vector.shape_cast %70 : vector<1x8x4xf32> to vector<8x4xf32>
    %cst_51 = arith.constant dense<0.000000e+00> : vector<8x128xf32>
    %72 = tpu.matmul %71, %69, %cst_51 {dimension_numbers = #tpu.dot_dimension_numbers<[1], [0], [0], [1], [0, 0, 1, 1], [], []>} : vector<8x4xf32>, vector<4x128xf32>, vector<8x128xf32> -> vector<8x128xf32>
    %73 = arith.addf %68, %72 : vector<8x128xf32>
    %74 = vector.extract_strided_slice %9 {offsets = [0, 6], sizes = [4, 128], strides = [1, 1]} : vector<4x136xf32> to vector<4x128xf32>
    %c13 = arith.constant 13 : index
    %c0_52 = arith.constant 0 : index
    %c0_53 = arith.constant 0 : index
    %75 = vector.load %arg6[%c13, %c0_52, %c0_53] : memref<15x8x4xf32, #tpu.memory_space<vmem>>, vector<1x8x4xf32>
    %76 = vector.shape_cast %75 : vector<1x8x4xf32> to vector<8x4xf32>
    %cst_54 = arith.constant dense<0.000000e+00> : vector<8x128xf32>
    %77 = tpu.matmul %76, %74, %cst_54 {dimension_numbers = #tpu.dot_dimension_numbers<[1], [0], [0], [1], [0, 0, 1, 1], [], []>} : vector<8x4xf32>, vector<4x128xf32>, vector<8x128xf32> -> vector<8x128xf32>
    %78 = arith.addf %73, %77 : vector<8x128xf32>
    %79 = vector.extract_strided_slice %4 {offsets = [0, 7], sizes = [4, 128], strides = [1, 1]} : vector<4x136xf32> to vector<4x128xf32>
    %c14 = arith.constant 14 : index
    %c0_55 = arith.constant 0 : index
    %c0_56 = arith.constant 0 : index
    %80 = vector.load %arg6[%c14, %c0_55, %c0_56] : memref<15x8x4xf32, #tpu.memory_space<vmem>>, vector<1x8x4xf32>
    %81 = vector.shape_cast %80 : vector<1x8x4xf32> to vector<8x4xf32>
    %cst_57 = arith.constant dense<0.000000e+00> : vector<8x128xf32>
    %82 = tpu.matmul %81, %79, %cst_57 {dimension_numbers = #tpu.dot_dimension_numbers<[1], [0], [0], [1], [0, 0, 1, 1], [], []>} : vector<8x4xf32>, vector<4x128xf32>, vector<8x128xf32> -> vector<8x128xf32>
    %83 = arith.addf %78, %82 : vector<8x128xf32>
    %c0_58 = arith.constant 0 : index
    %84 = memref.load %arg10[%c0_58] : memref<1xf32, #tpu.memory_space<smem>>
    %c0_59 = arith.constant 0 : index
    %c0_60 = arith.constant 0 : index
    %85 = vector.load %arg8[%c0_59, %c0_60] : memref<8x1xf32, #tpu.memory_space<vmem>>, vector<8x1xf32>
    %86 = vector.broadcast %85 : vector<8x1xf32> to vector<8x128xf32>
    %87 = arith.addf %83, %86 : vector<8x128xf32>
    %cst_61 = arith.constant 0.000000e+00 : f32
    %88 = vector.broadcast %cst_61 : f32 to vector<8x128xf32>
    %89 = arith.cmpf ogt, %87, %88 : vector<8x128xf32>
    %90 = vector.broadcast %84 : f32 to vector<8x128xf32>
    %91 = arith.mulf %90, %87 : vector<8x128xf32>
    %92 = arith.select %89, %87, %91 : vector<8x128xi1>, vector<8x128xf32>
    %93 = vector.extract_strided_slice %9 {offsets = [0, 3], sizes = [4, 128], strides = [1, 1]} : vector<4x136xf32> to vector<4x128xf32>
    %c0_62 = arith.constant 0 : index
    %c0_63 = arith.constant 0 : index
    %94 = vector.load %arg7[%c0_62, %c0_63] : memref<8x4xf32, #tpu.memory_space<vmem>>, vector<8x4xf32>
    %cst_64 = arith.constant dense<0.000000e+00> : vector<8x128xf32>
    %95 = tpu.matmul %94, %93, %cst_64 {dimension_numbers = #tpu.dot_dimension_numbers<[1], [0], [0], [1], [0, 0, 1, 1], [], []>} : vector<8x4xf32>, vector<4x128xf32>, vector<8x128xf32> -> vector<8x128xf32>
    %c0_65 = arith.constant 0 : index
    %c0_66 = arith.constant 0 : index
    %96 = vector.load %arg9[%c0_65, %c0_66] : memref<8x1xf32, #tpu.memory_space<vmem>>, vector<8x1xf32>
    %97 = vector.broadcast %96 : vector<8x1xf32> to vector<8x128xf32>
    %98 = arith.addf %95, %97 : vector<8x128xf32>
    %99 = arith.addf %92, %98 : vector<8x128xf32>
    %c0_67 = arith.constant 0 : index
    %c0_68 = arith.constant 0 : index
    %c0_69 = arith.constant 0 : index
    %100 = vector.load %arg11[%c0_67, %c0_68, %c0_69] : memref<1x8x128xf32, #tpu.memory_space<vmem>>, vector<1x8x128xf32>
    %101 = vector.shape_cast %100 : vector<1x8x128xf32> to vector<8x128xf32>
    %102 = vector.shape_cast %99 : vector<8x128xf32> to vector<1x8x128xf32>
    tpu.vector_store %arg11[%c0_67, %c0_68, %c0_69], %102 {strides = array<i32>} : memref<1x8x128xf32, #tpu.memory_space<vmem>>, vector<1x8x128xf32>,
    return
  }
  func.func @transform_0(%arg0: i32, %arg1: i32) -> (i32, i32, i32) {
    %c0_i32 = arith.constant 0 : i32
    %c0_i32_0 = arith.constant 0 : i32
    return %arg0, %c0_i32, %arg1 : i32, i32, i32
  }
  func.func @transform_1(%arg0: i32, %arg1: i32) -> (i32, i32, i32) {
    %c0_i32 = arith.constant 0 : i32
    %c0_i32_0 = arith.constant 0 : i32
    return %arg0, %c0_i32, %arg1 : i32, i32, i32
  }
  func.func @transform_2(%arg0: i32, %arg1: i32) -> (i32, i32, i32, i32) {
    %c0_i32 = arith.constant 0 : i32
    %c0_i32_0 = arith.constant 0 : i32
    %c0_i32_1 = arith.constant 0 : i32
    return %arg0, %arg1, %c0_i32, %c0_i32_0 : i32, i32, i32, i32
  }
  func.func @transform_3(%arg0: i32, %arg1: i32) -> (i32, i32, i32, i32) {
    %c0_i32 = arith.constant 0 : i32
    %c0_i32_0 = arith.constant 0 : i32
    %c0_i32_1 = arith.constant 0 : i32
    return %arg0, %arg1, %c0_i32, %c0_i32_0 : i32, i32, i32, i32
  }
  func.func @transform_4(%arg0: i32, %arg1: i32) -> (i32, i32, i32) {
    %c0_i32 = arith.constant 0 : i32
    %c0_i32_0 = arith.constant 0 : i32
    %c0_i32_1 = arith.constant 0 : i32
    %c0_i32_2 = arith.constant 0 : i32
    return %c0_i32, %c0_i32_0, %c0_i32_1 : i32, i32, i32
  }
  func.func @transform_5(%arg0: i32, %arg1: i32) -> (i32, i32) {
    %c0_i32 = arith.constant 0 : i32
    %c0_i32_0 = arith.constant 0 : i32
    %c0_i32_1 = arith.constant 0 : i32
    return %c0_i32, %c0_i32_0 : i32, i32
  }
  func.func @transform_6(%arg0: i32, %arg1: i32) -> (i32, i32) {
    %c0_i32 = arith.constant 0 : i32
    %c0_i32_0 = arith.constant 0 : i32
    %c0_i32_1 = arith.constant 0 : i32
    return %c0_i32, %c0_i32_0 : i32, i32
  }
  func.func @transform_7(%arg0: i32, %arg1: i32) -> (i32, i32) {
    %c0_i32 = arith.constant 0 : i32
    %c0_i32_0 = arith.constant 0 : i32
    %c0_i32_1 = arith.constant 0 : i32
    return %c0_i32, %c0_i32_0 : i32, i32
  }
  func.func @transform_8(%arg0: i32, %arg1: i32) -> i32 {
    %c0_i32 = arith.constant 0 : i32
    %c0_i32_0 = arith.constant 0 : i32
    return %c0_i32 : i32
  }
  func.func @transform_9(%arg0: i32, %arg1: i32) -> (i32, i32, i32) {
    %c0_i32 = arith.constant 0 : i32
    %c0_i32_0 = arith.constant 0 : i32
    return %arg0, %c0_i32, %arg1 : i32, i32, i32
  }
}

</mosaic_0001>

<llo_original>
// kernel: tpu_custom_call.1
$region0: #{tpu_custom_call.1}
  #allocation0 [shape = 'u32[]', space=smem, size = 0x4, offset = 0x4, fixed_abs, tag = 'smem constant byte address 0x4 - core index']
  #allocation1 [shape = 'u32[72,128]{1,0:T(1,128)}', space=vmem, size = 0x9000, scoped, tag = 'internal scratch']
  #allocation2 [shape = 'f32[1]{0:T(128)S(6)}', space=smem, size = 0x200, scoped, tag = 'scoped memory for tpu_custom_call.1']
  %s0 = inlined_call_operand.vmem [shape: f32[2,4,136], index: 0, kind: input, shape index: {}]
  %s1 = inlined_call_operand.vmem [shape: f32[2,4,136], index: 1, kind: input, shape index: {}]
  %s2 = inlined_call_operand.vmem [shape: f32[2,1,4,8], index: 2, kind: input, shape index: {}]
  %s3 = inlined_call_operand.vmem [shape: f32[2,1,4,8], index: 3, kind: input, shape index: {}]
  %s4 = inlined_call_operand.vmem [shape: f32[15,8,4], index: 4, kind: input, shape index: {}]
  %s5 = inlined_call_operand.vmem [shape: f32[8,4], index: 5, kind: input, shape index: {}]
  %s6 = inlined_call_operand.vmem [shape: f32[8,1], index: 6, kind: input, shape index: {}]
  %s7 = inlined_call_operand.vmem [shape: f32[8,1], index: 7, kind: input, shape index: {}]
  %s8 = inlined_call_operand.<no memory space> [shape: f32[1], index: 8, kind: input, shape index: {}]
  %s9 = inlined_call_operand.hbm [shape: f32[2,8,128], index: 9, kind: output, shape index: {}]
  %s10 = sld [smem:[#allocation0]]
  $region69: #{tpu_custom_call.1} parent=0
    _
  %s12 = ssub.s32 1, %s10
  %s13 = scalar_select 0, %s12, %s10
  %14 = sst [smem:[#allocation2]] %s8
  $region1: #{tpu_custom_call.1} parent=0
    #allocation3 [shape = 'u8[8192]{0}', space=vmem, size = 0x2000, scoped, tag = 'output window, operand 0']
    #allocation4 [shape = 's32[2]{0}', space=sflag, size = 0x8, scoped, tag = 'scoped memory for tpu_custom_call.1']
    %15 = vsyncpa [#allocation4], 0
    %s16 = scalar_lea.sflag [#allocation4], 1
    %17 = vsyncpa %s16, 0
    loop: start=0, step=1, limit=4
    $region2: #{tpu_custom_call.1} parent=1 // loop_pre_header
      _
    $region3: #{tpu_custom_call.1} parent=1 // loop_header
      %s19 = sphi 0, %s23
      %p20 = scmp.ge.s32.totalorder %s19, 4
      %s26 = sphi 0, %s38
      %s27 = sphi 0, %s34
      %s28 = sphi 0, %s26
      %s29 = sphi 0, %s27
      %s30 = sphi 0, %s28
      %s31 = sphi 0, %s29
      %s43 = sphi 0, %s45
      %s46 = sphi 0, %s43
      %s47 = sphi 0, %s46
      %s63 = sphi 0, %s47
      %s71 = sphi 0, %s73
      %s74 = sphi 0, %s71
      %s75 = sphi 0, %s74
      %s91 = sphi 0, %s75
      %s99 = sphi 0, %s101
      %s102 = sphi 0, %s99
      %s103 = sphi 0, %s102
      %s119 = sphi 0, %s103
      %s127 = sphi 0, %s129
      %s130 = sphi 0, %s127
      %s131 = sphi 0, %s130
      %s147 = sphi 0, %s131
      %s151 = sphi 0, %s151
      %s153 = sphi 0, %s151
      %s154 = sphi 0, %s153
      %s168 = sphi 0, %s154
      %s172 = sphi 0, %s172
      %s174 = sphi 0, %s172
      %s175 = sphi 0, %s174
      %s189 = sphi 0, %s175
      %s193 = sphi 0, %s193
      %s195 = sphi 0, %s193
      %s196 = sphi 0, %s195
      %s210 = sphi 0, %s196
      %s214 = sphi 0, %s214
      %s216 = sphi 0, %s214
      %s217 = sphi 0, %s216
      %s231 = sphi 0, %s217
      %s235 = sphi 0, %s235
      %s237 = sphi 0, %s235
      %s238 = sphi 0, %s237
      %s252 = sphi 0, %s238
      %s260 = sphi 0, %s262
      %s263 = sphi 0, %s260
      %s264 = sphi 0, %s263
      %s280 = sphi 0, %s264
    $region4: #{tpu_custom_call.1} parent=1 // loop_header_branch
      %22 = sbr.rel (%p20) target = $region8
    $region5: #{tpu_custom_call.1} parent=1 // loop_body
      %s24 = ssub.s32 %s19, 1
      %s25 = ssub.s32 %s19, 2
      %s32 = sadd.s32 1, %s27
      %p33 = scmp.ge.s32.totalorder %s32, 1
      %s34 = scalar_select %p33, 0, %s32
      %s35 = sadd.s32 1, %s26
      %s36 = scalar_select %p33, %s35, %s26
      %p37 = scmp.ge.s32.totalorder %s36, 2
      %s38 = scalar_select %p37, 0, %s36
      %s39 = ssub.s32 %s26, %s38
      %s40 = ssub.s32 %s27, %s34
      %s41 = sor.u32 %s39, %s40
      %p42 = scmp.eq.s32.totalorder %s41, 0
      %s44 = sadd.s32 %s43, 1
      %s45 = scalar_select %p42, %s43, %s44
      %p48 = pneg %p42
      %p49 = scmp.eq.s32.totalorder %s19, 1
      %p50 = por %p48, %p49
      %p51 = scmp.ne.s32.totalorder %s43, %s46
      %p52 = scmp.eq.s32.totalorder %s19, 0
      %p53 = por %p51, %p52
      %p54 = scmp.ne.s32.totalorder %s43, %s46
      %p55 = scmp.eq.s32.totalorder %s24, 1
      %p56 = por %p54, %p55
      %p57 = scmp.ne.s32.totalorder %s46, %s47
      %p58 = scmp.eq.s32.totalorder %s24, 0
      %p59 = por %p57, %p58
      %p60 = scmp.ne.s32.totalorder %s46, %s47
      %p61 = scmp.eq.s32.totalorder %s25, 1
      %p62 = por %p60, %p61
      %p64 = scmp.ne.s32.totalorder %s47, %s63
      %p65 = scmp.eq.s32.totalorder %s25, 0
      %p66 = por %p64, %p65
      %s67 = ssub.s32 %s26, %s38
      %s68 = ssub.s32 %s27, %s34
      %s69 = sor.u32 %s67, %s68
      %p70 = scmp.eq.s32.totalorder %s69, 0
      %s72 = sadd.s32 %s71, 1
      %s73 = scalar_select %p70, %s71, %s72
      %p76 = pneg %p70
      %p77 = scmp.eq.s32.totalorder %s19, 1
      %p78 = por %p76, %p77
      %p79 = scmp.ne.s32.totalorder %s71, %s74
      %p80 = scmp.eq.s32.totalorder %s19, 0
      %p81 = por %p79, %p80
      %p82 = scmp.ne.s32.totalorder %s71, %s74
      %p83 = scmp.eq.s32.totalorder %s24, 1
      %p84 = por %p82, %p83
      %p85 = scmp.ne.s32.totalorder %s74, %s75
      %p86 = scmp.eq.s32.totalorder %s24, 0
      %p87 = por %p85, %p86
      %p88 = scmp.ne.s32.totalorder %s74, %s75
      %p89 = scmp.eq.s32.totalorder %s25, 1
      %p90 = por %p88, %p89
      %p92 = scmp.ne.s32.totalorder %s75, %s91
      %p93 = scmp.eq.s32.totalorder %s25, 0
      %p94 = por %p92, %p93
      %s95 = ssub.s32 %s26, %s38
      %s96 = ssub.s32 %s27, %s34
      %s97 = sor.u32 %s95, %s96
      %p98 = scmp.eq.s32.totalorder %s97, 0
      %s100 = sadd.s32 %s99, 1
      %s101 = scalar_select %p98, %s99, %s100
      %p104 = pneg %p98
      %p105 = scmp.eq.s32.totalorder %s19, 1
      %p106 = por %p104, %p105
      %p107 = scmp.ne.s32.totalorder %s99, %s102
      %p108 = scmp.eq.s32.totalorder %s19, 0
      %p109 = por %p107, %p108
      %p110 = scmp.ne.s32.totalorder %s99, %s102
      %p111 = scmp.eq.s32.totalorder %s24, 1
      %p112 = por %p110, %p111
      %p113 = scmp.ne.s32.totalorder %s102, %s103
      %p114 = scmp.eq.s32.totalorder %s24, 0
      %p115 = por %p113, %p114
      %p116 = scmp.ne.s32.totalorder %s102, %s103
      %p117 = scmp.eq.s32.totalorder %s25, 1
      %p118 = por %p116, %p117
      %p120 = scmp.ne.s32.totalorder %s103, %s119
      %p121 = scmp.eq.s32.totalorder %s25, 0
      %p122 = por %p120, %p121
      %s123 = ssub.s32 %s26, %s38
      %s124 = ssub.s32 %s27, %s34
      %s125 = sor.u32 %s123, %s124
      %p126 = scmp.eq.s32.totalorder %s125, 0
      %s128 = sadd.s32 %s127, 1
      %s129 = scalar_select %p126, %s127, %s128
      %p132 = pneg %p126
      %p133 = scmp.eq.s32.totalorder %s19, 1
      %p134 = por %p132, %p133
      %p135 = scmp.ne.s32.totalorder %s127, %s130
      %p136 = scmp.eq.s32.totalorder %s19, 0
      %p137 = por %p135, %p136
      %p138 = scmp.ne.s32.totalorder %s127, %s130
      %p139 = scmp.eq.s32.totalorder %s24, 1
      %p140 = por %p138, %p139
      %p141 = scmp.ne.s32.totalorder %s130, %s131
      %p142 = scmp.eq.s32.totalorder %s24, 0
      %p143 = por %p141, %p142
      %p144 = scmp.ne.s32.totalorder %s130, %s131
      %p145 = scmp.eq.s32.totalorder %s25, 1
      %p146 = por %p144, %p145
      %p148 = scmp.ne.s32.totalorder %s131, %s147
      %p149 = scmp.eq.s32.totalorder %s25, 0
      %p150 = por %p148, %p149
      %s152 = sadd.s32 %s151, 1
      %p155 = scmp.eq.s32.totalorder %s19, 1
      %p156 = scmp.ne.s32.totalorder %s151, %s153
      %p157 = scmp.eq.s32.totalorder %s19, 0
      %p158 = por %p156, %p157
      %p159 = scmp.ne.s32.totalorder %s151, %s153
      %p160 = scmp.eq.s32.totalorder %s24, 1
      %p161 = por %p159, %p160
      %p162 = scmp.ne.s32.totalorder %s153, %s154
      %p163 = scmp.eq.s32.totalorder %s24, 0
      %p164 = por %p162, %p163
      %p165 = scmp.ne.s32.totalorder %s153, %s154
      %p166 = scmp.eq.s32.totalorder %s25, 1
      %p167 = por %p165, %p166
      %p169 = scmp.ne.s32.totalorder %s154, %s168
      %p170 = scmp.eq.s32.totalorder %s25, 0
      %p171 = por %p169, %p170
      %s173 = sadd.s32 %s172, 1
      %p176 = scmp.eq.s32.totalorder %s19, 1
      %p177 = scmp.ne.s32.totalorder %s172, %s174
      %p178 = scmp.eq.s32.totalorder %s19, 0
      %p179 = por %p177, %p178
      %p180 = scmp.ne.s32.totalorder %s172, %s174
      %p181 = scmp.eq.s32.totalorder %s24, 1
      %p182 = por %p180, %p181
      %p183 = scmp.ne.s32.totalorder %s174, %s175
      %p184 = scmp.eq.s32.totalorder %s24, 0
      %p185 = por %p183, %p184
      %p186 = scmp.ne.s32.totalorder %s174, %s175
      %p187 = scmp.eq.s32.totalorder %s25, 1
      %p188 = por %p186, %p187
      %p190 = scmp.ne.s32.totalorder %s175, %s189
      %p191 = scmp.eq.s32.totalorder %s25, 0
      %p192 = por %p190, %p191
      %s194 = sadd.s32 %s193, 1
      %p197 = scmp.eq.s32.totalorder %s19, 1
      %p198 = scmp.ne.s32.totalorder %s193, %s195
      %p199 = scmp.eq.s32.totalorder %s19, 0
      %p200 = por %p198, %p199
      %p201 = scmp.ne.s32.totalorder %s193, %s195
      %p202 = scmp.eq.s32.totalorder %s24, 1
      %p203 = por %p201, %p202
      %p204 = scmp.ne.s32.totalorder %s195, %s196
      %p205 = scmp.eq.s32.totalorder %s24, 0
      %p206 = por %p204, %p205
      %p207 = scmp.ne.s32.totalorder %s195, %s196
      %p208 = scmp.eq.s32.totalorder %s25, 1
      %p209 = por %p207, %p208
      %p211 = scmp.ne.s32.totalorder %s196, %s210
      %p212 = scmp.eq.s32.totalorder %s25, 0
      %p213 = por %p211, %p212
      %s215 = sadd.s32 %s214, 1
      %p218 = scmp.eq.s32.totalorder %s19, 1
      %p219 = scmp.ne.s32.totalorder %s214, %s216
      %p220 = scmp.eq.s32.totalorder %s19, 0
      %p221 = por %p219, %p220
      %p222 = scmp.ne.s32.totalorder %s214, %s216
      %p223 = scmp.eq.s32.totalorder %s24, 1
      %p224 = por %p222, %p223
      %p225 = scmp.ne.s32.totalorder %s216, %s217
      %p226 = scmp.eq.s32.totalorder %s24, 0
      %p227 = por %p225, %p226
      %p228 = scmp.ne.s32.totalorder %s216, %s217
      %p229 = scmp.eq.s32.totalorder %s25, 1
      %p230 = por %p228, %p229
      %p232 = scmp.ne.s32.totalorder %s217, %s231
      %p233 = scmp.eq.s32.totalorder %s25, 0
      %p234 = por %p232, %p233
      %s236 = sadd.s32 %s235, 1
      %p239 = scmp.eq.s32.totalorder %s19, 1
      %p240 = scmp.ne.s32.totalorder %s235, %s237
      %p241 = scmp.eq.s32.totalorder %s19, 0
      %p242 = por %p240, %p241
      %p243 = scmp.ne.s32.totalorder %s235, %s237
      %p244 = scmp.eq.s32.totalorder %s24, 1
      %p245 = por %p243, %p244
      %p246 = scmp.ne.s32.totalorder %s237, %s238
      %p247 = scmp.eq.s32.totalorder %s24, 0
      %p248 = por %p246, %p247
      %p249 = scmp.ne.s32.totalorder %s237, %s238
      %p250 = scmp.eq.s32.totalorder %s25, 1
      %p251 = por %p249, %p250
      %p253 = scmp.ne.s32.totalorder %s238, %s252
      %p254 = scmp.eq.s32.totalorder %s25, 0
      %p255 = por %p253, %p254
      %s256 = ssub.s32 %s26, %s38
      %s257 = ssub.s32 %s27, %s34
      %s258 = sor.u32 %s256, %s257
      %p259 = scmp.eq.s32.totalorder %s258, 0
      %s261 = sadd.s32 %s260, 1
      %s262 = scalar_select %p259, %s260, %s261
      %p265 = pneg %p259
      %p266 = scmp.eq.s32.totalorder %s19, 1
      %p267 = por %p265, %p266
      %p268 = scmp.ne.s32.totalorder %s260, %s263
      %p269 = scmp.eq.s32.totalorder %s19, 0
      %p270 = por %p268, %p269
      %p271 = scmp.ne.s32.totalorder %s260, %s263
      %p272 = scmp.eq.s32.totalorder %s24, 1
      %p273 = por %p271, %p272
      %p274 = scmp.ne.s32.totalorder %s263, %s264
      %p275 = scmp.eq.s32.totalorder %s24, 0
      %p276 = por %p274, %p275
      %p277 = scmp.ne.s32.totalorder %s263, %s264
      %p278 = scmp.eq.s32.totalorder %s25, 1
      %p279 = por %p277, %p278
      %p281 = scmp.ne.s32.totalorder %s264, %s280
      %p282 = scmp.eq.s32.totalorder %s25, 0
      %p283 = por %p281, %p282
      %p284 = scmp.le.s32.totalorder 1, %s19
      %p285 = scmp.lt.s32.totalorder %s19, 3
      %p286 = pnand %p284, %p285
      %p287 = pneg %p286
      // Predicated region
      $region9: #{tpu_custom_call.1} parent=5 // pred_check
        _
      $region10: #{tpu_custom_call.1} parent=5 // pred_check_branch
        %289 = sbr.rel (%p286) target = $region12
      $region11: #{tpu_custom_call.1} parent=5 // pred_region
        %s290 = ssub.s32 %s19, 1
        // Predicated region
        $region13: #{tpu_custom_call.1} parent=11 // pred_check
          %p291 = pneg %p164
        $region14: #{tpu_custom_call.1} parent=11 // pred_check_branch
          %293 = sbr.rel (%p291) target = $region16
        $region15: #{tpu_custom_call.1} parent=11 // pred_region
          _
        $region16: #{tpu_custom_call.1} parent=11 // pred_fallthru
          _
        // Predicated region
        $region17: #{tpu_custom_call.1} parent=11 // pred_check
          %p294 = pneg %p185
        $region18: #{tpu_custom_call.1} parent=11 // pred_check_branch
          %296 = sbr.rel (%p294) target = $region20
        $region19: #{tpu_custom_call.1} parent=11 // pred_region
          _
        $region20: #{tpu_custom_call.1} parent=11 // pred_fallthru
          _
        // Predicated region
        $region21: #{tpu_custom_call.1} parent=11 // pred_check
          %p297 = pneg %p206
        $region22: #{tpu_custom_call.1} parent=11 // pred_check_branch
          %299 = sbr.rel (%p297) target = $region24
        $region23: #{tpu_custom_call.1} parent=11 // pred_region
          _
        $region24: #{tpu_custom_call.1} parent=11 // pred_fallthru
          _
        // Predicated region
        $region25: #{tpu_custom_call.1} parent=11 // pred_check
          %p300 = pneg %p227
        $region26: #{tpu_custom_call.1} parent=11 // pred_check_branch
          %302 = sbr.rel (%p300) target = $region28
        $region27: #{tpu_custom_call.1} parent=11 // pred_region
          _
        $region28: #{tpu_custom_call.1} parent=11 // pred_fallthru
          _
        // Predicated region
        $region29: #{tpu_custom_call.1} parent=11 // pred_check
          %p303 = pneg %p248
        $region30: #{tpu_custom_call.1} parent=11 // pred_check_branch
          %305 = sbr.rel (%p303) target = $region32
        $region31: #{tpu_custom_call.1} parent=11 // pred_region
          _
        $region32: #{tpu_custom_call.1} parent=11 // pred_fallthru
          _
      $region12: #{tpu_custom_call.1} parent=5 // pred_fallthru
        _
      %p306 = scmp.lt.s32.totalorder %s19, 2
      // Predicated region
      $region33: #{tpu_custom_call.1} parent=5 // pred_check
        %p307 = pneg %p306
      $region34: #{tpu_custom_call.1} parent=5 // pred_check_branch
        %309 = sbr.rel (%p307) target = $region36
      $region35: #{tpu_custom_call.1} parent=5 // pred_region
        // Predicated region
        $region37: #{tpu_custom_call.1} parent=35 // pred_check
          %p310 = pneg %p53
        $region38: #{tpu_custom_call.1} parent=35 // pred_check_branch
          %312 = sbr.rel (%p310) target = $region40
        $region39: #{tpu_custom_call.1} parent=35 // pred_region
          %p313 = scmp.lt.s32.totalorder %s26, 1
          %s314 = scalar_select %p313, %s26, 1
          %p315 = scmp.lt.s32.totalorder %s27, 1
          %s316 = scalar_select %p315, %s27, 1
          %s317 = smul.addr %s314, 2
          %s318 = sadd.s32 %s316, %s317
          %s319 = smul.addr %s318, 4
          %s320 = scalar_lea.vmem %s0, %s319
        $region40: #{tpu_custom_call.1} parent=35 // pred_fallthru
          _
        // Predicated region
        $region41: #{tpu_custom_call.1} parent=35 // pred_check
          %p321 = pneg %p81
        $region42: #{tpu_custom_call.1} parent=35 // pred_check_branch
          %323 = sbr.rel (%p321) target = $region44
        $region43: #{tpu_custom_call.1} parent=35 // pred_region
          %p324 = scmp.lt.s32.totalorder %s26, 1
          %s325 = scalar_select %p324, %s26, 1
          %p326 = scmp.lt.s32.totalorder %s27, 1
          %s327 = scalar_select %p326, %s27, 1
          %s328 = smul.addr %s325, 2
          %s329 = sadd.s32 %s327, %s328
          %s330 = smul.addr %s329, 4
          %s331 = scalar_lea.vmem %s1, %s330
        $region44: #{tpu_custom_call.1} parent=35 // pred_fallthru
          _
        // Predicated region
        $region45: #{tpu_custom_call.1} parent=35 // pred_check
          %p332 = pneg %p109
        $region46: #{tpu_custom_call.1} parent=35 // pred_check_branch
          %334 = sbr.rel (%p332) target = $region48
        $region47: #{tpu_custom_call.1} parent=35 // pred_region
          %p335 = scmp.lt.s32.totalorder %s26, 1
          %s336 = scalar_select %p335, %s26, 1
          %p337 = scmp.lt.s32.totalorder %s27, 0
          %s338 = scalar_select %p337, %s27, 0
          %s339 = sadd.s32 %s338, %s336
          %s340 = smul.addr %s339, 4
          %s341 = scalar_lea.vmem %s2, %s340
        $region48: #{tpu_custom_call.1} parent=35 // pred_fallthru
          _
        // Predicated region
        $region49: #{tpu_custom_call.1} parent=35 // pred_check
          %p342 = pneg %p137
        $region50: #{tpu_custom_call.1} parent=35 // pred_check_branch
          %344 = sbr.rel (%p342) target = $region52
        $region51: #{tpu_custom_call.1} parent=35 // pred_region
          %p345 = scmp.lt.s32.totalorder %s26, 1
          %s346 = scalar_select %p345, %s26, 1
          %p347 = scmp.lt.s32.totalorder %s27, 0
          %s348 = scalar_select %p347, %s27, 0
          %s349 = sadd.s32 %s348, %s346
          %s350 = smul.addr %s349, 4
          %s351 = scalar_lea.vmem %s3, %s350
        $region52: #{tpu_custom_call.1} parent=35 // pred_fallthru
          _
      $region36: #{tpu_custom_call.1} parent=5 // pred_fallthru
        _
      %p352 = scmp.le.s32.totalorder 1, %s19
      %p353 = scmp.lt.s32.totalorder %s19, 3
      %p354 = pnand %p352, %p353
      %p355 = pneg %p354
      // Predicated region
      $region53: #{tpu_custom_call.1} parent=5 // pred_check
        _
      $region54: #{tpu_custom_call.1} parent=5 // pred_check_branch
        %357 = sbr.rel (%p354) target = $region56
      $region55: #{tpu_custom_call.1} parent=5 // pred_region
        %s358 = ssub.s32 %s19, 1
        %p359 = scmp.lt.s32.totalorder %s28, 1
        %s360 = scalar_select %p359, %s28, 1
        %p361 = scmp.lt.s32.totalorder %s29, 1
        %s362 = scalar_select %p361, %s29, 1
        %s363 = smul.addr %s360, 2
        %s364 = sadd.s32 %s362, %s363
        %s365 = smul.addr %s364, 4
        %s366 = scalar_lea.vmem %s0, %s365
        %p367 = pneg %p59
        %p368 = pneg %p56
        %p369 = scmp.lt.s32.totalorder %s28, 1
        %s370 = scalar_select %p369, %s28, 1
        %p371 = scmp.lt.s32.totalorder %s29, 1
        %s372 = scalar_select %p371, %s29, 1
        %s373 = smul.addr %s370, 2
        %s374 = sadd.s32 %s372, %s373
        %s375 = smul.addr %s374, 4
        %s376 = scalar_lea.vmem %s1, %s375
        %p377 = pneg %p87
        %p378 = pneg %p84
        %p379 = scmp.lt.s32.totalorder %s28, 1
        %s380 = scalar_select %p379, %s28, 1
        %p381 = scmp.lt.s32.totalorder %s29, 0
        %s382 = scalar_select %p381, %s29, 0
        %s383 = sadd.s32 %s382, %s380
        %s384 = smul.addr %s383, 4
        %s385 = scalar_lea.vmem %s2, %s384
        %p386 = pneg %p115
        %p387 = pneg %p112
        %p388 = scmp.lt.s32.totalorder %s28, 1
        %s389 = scalar_select %p388, %s28, 1
        %p390 = scmp.lt.s32.totalorder %s29, 0
        %s391 = scalar_select %p390, %s29, 0
        %s392 = sadd.s32 %s391, %s389
        %s393 = smul.addr %s392, 4
        %s394 = scalar_lea.vmem %s3, %s393
        %p395 = pneg %p143
        %p396 = pneg %p140
        %p397 = pneg %p164
        %p398 = pneg %p161
        %p399 = pneg %p185
        %p400 = pneg %p182
        %p401 = pneg %p206
        %p402 = pneg %p203
        %p403 = pneg %p227
        %p404 = pneg %p224
        %p405 = pneg %p248
        %p406 = pneg %p245
        %p407 = pneg %p276
        %p408 = pneg %p273
        %s409 = sand.u32 %s263, 1
        %s410 = scalar_lea.sflag [#allocation4], %s409
        %s411 = sand.u32 %s263, 1
        %s412 = smul.addr %s411, 8
        %s413 = scalar_lea.vmem [#allocation3], %s412
        %p414 = scmp.lt.s32.totalorder %s28, 1
        %s415 = scalar_select %p414, %s28, 1
        %p416 = scmp.lt.s32.totalorder %s29, 1
        %s417 = scalar_select %p416, %s29, 1
        %s418 = smul.addr %s415, 2
        %s419 = sadd.s32 %s417, %s418
        %s420 = smul.addr %s419, 4
        %s421 = scalar_lea.vmem %s0, %s420
        %p422 = scmp.lt.s32.totalorder %s28, 1
        %s423 = scalar_select %p422, %s28, 1
        %p424 = scmp.lt.s32.totalorder %s29, 1
        %s425 = scalar_select %p424, %s29, 1
        %s426 = smul.addr %s423, 2
        %s427 = sadd.s32 %s425, %s426
        %s428 = smul.addr %s427, 4
        %s429 = scalar_lea.vmem %s1, %s428
        %p430 = scmp.lt.s32.totalorder %s28, 1
        %s431 = scalar_select %p430, %s28, 1
        %p432 = scmp.lt.s32.totalorder %s29, 0
        %s433 = scalar_select %p432, %s29, 0
        %s434 = sadd.s32 %s433, %s431
        %s435 = smul.addr %s434, 4
        %s436 = scalar_lea.vmem %s2, %s435
        %p437 = scmp.lt.s32.totalorder %s28, 1
        %s438 = scalar_select %p437, %s28, 1
        %p439 = scmp.lt.s32.totalorder %s29, 0
        %s440 = scalar_select %p439, %s29, 0
        %s441 = sadd.s32 %s440, %s438
        %s442 = smul.addr %s441, 4
        %s443 = scalar_lea.vmem %s3, %s442
        %v444 = vld [vmem:[%s421] sm:$0xf]
        %v445 = vld [vmem:[%s436] sm:$0xf]
        %v446 = vld [vmem:[%s429] sm:$0xf]
        %v447 = vld [vmem:[%s443] sm:$0xf]
        %v448 = vld [vmem:[%s4] sm:$0xff]
        %s449 = scalar_lea.vmem %s4, 8
        %v450 = vld [vmem:[%s449] sm:$0xff]
        %vm451 = vcmask 31744
        %v453 = vsel %vm451, %v450, 0
        %vm455 = vcmask 1043456
        %v457 = vsel %vm455, %v446, 0
        %459 = vmatpush.msra.mxu0 0.0
        %460 = vmatpush.msra.mxu0 0.0
        %461 = vmatpush.msra.mxu0 0.0
        %462 = vmatpush.msra.mxu0 0.0
        %463 = vmatpush.msra.mxu0 0.0
        %464 = vmatpush.msra.mxu0 0.0
        %465 = vmatpush.msra.mxu0 0.0
        %466 = vmatpush.msra.mxu0 0.0
        %467 = vmatpush.msra.mxu0 0.0
        %468 = vmatpush.msra.mxu0 0.0
        %469 = vmatpush.msra.mxu0 0.0
        %470 = vmatpush.msra.mxu0 0.0
        %471 = vmatpush.msra.mxu0 0.0
        %472 = vmatpush.msra.mxu0 0.0
        %473 = vmatpush.msra.mxu0 0.0
        %474 = vmatpush.msra.mxu0 %v457
        %475 = vmatmul.f32.gmra.mxu0 %v453
        %v476 = vpop.f32.mrf.mxu0
        %v477 = vadd.f32 0.0, %v476
        %478 = vdwg.mxu0
        %v480 = vsel %vm451, %v448, 0
        %v483 = vsel %vm455, %v444, 0
        %485 = vmatpush.msra.mxu0 0.0
        %486 = vmatpush.msra.mxu0 0.0
        %487 = vmatpush.msra.mxu0 0.0
        %488 = vmatpush.msra.mxu0 0.0
        %489 = vmatpush.msra.mxu0 0.0
        %490 = vmatpush.msra.mxu0 0.0
        %491 = vmatpush.msra.mxu0 0.0
        %492 = vmatpush.msra.mxu0 0.0
        %493 = vmatpush.msra.mxu0 0.0
        %494 = vmatpush.msra.mxu0 0.0
        %495 = vmatpush.msra.mxu0 0.0
        %496 = vmatpush.msra.mxu0 0.0
        %497 = vmatpush.msra.mxu0 0.0
        %498 = vmatpush.msra.mxu0 0.0
        %499 = vmatpush.msra.mxu0 0.0
        %500 = vmatpush.msra.mxu0 %v483
        %501 = vmatmul.f32.gmra.mxu0 %v480
        %v502 = vpop.f32.mrf.mxu0
        %v503 = vadd.f32 %v477, %v502
        %504 = vdwg.mxu0
        %s505 = scalar_lea.vmem %s4, 16
        %v506 = vld [vmem:[%s505] sm:$0xff]
        %508 = vrot.lane.b32.xlu0 %v444, 127
        %v509 = vpop.permute.xlu0 %508
        %510 = vrot.lane.b32.xlu0 %v445, 127
        %v511 = vpop.permute.xlu0 %510
        %vm512 = vcmask 1039360
        %v513 = vsel %vm512, %v509, %v511
        %v515 = vsel %vm451, %v506, 0
        %v517 = vsel %vm455, %v513, 0
        %519 = vmatpush.msra.mxu0 0.0
        %520 = vmatpush.msra.mxu0 0.0
        %521 = vmatpush.msra.mxu0 0.0
        %522 = vmatpush.msra.mxu0 0.0
        %523 = vmatpush.msra.mxu0 0.0
        %524 = vmatpush.msra.mxu0 0.0
        %525 = vmatpush.msra.mxu0 0.0
        %526 = vmatpush.msra.mxu0 0.0
        %527 = vmatpush.msra.mxu0 0.0
        %528 = vmatpush.msra.mxu0 0.0
        %529 = vmatpush.msra.mxu0 0.0
        %530 = vmatpush.msra.mxu0 0.0
        %531 = vmatpush.msra.mxu0 0.0
        %532 = vmatpush.msra.mxu0 0.0
        %533 = vmatpush.msra.mxu0 0.0
        %534 = vmatpush.msra.mxu0 %v517
        %535 = vmatmul.f32.gmra.mxu0 %v515
        %v536 = vpop.f32.mrf.mxu0
        %v537 = vadd.f32 0.0, %v536
        %538 = vdwg.mxu0
        %v539 = vadd.f32 %v503, %v537
        %s540 = scalar_lea.vmem %s4, 24
        %v541 = vld [vmem:[%s540] sm:$0xff]
        %543 = vrot.lane.b32.xlu0 %v446, 127
        %v544 = vpop.permute.xlu0 %543
        %545 = vrot.lane.b32.xlu0 %v447, 127
        %v546 = vpop.permute.xlu0 %545
        %v547 = vsel %vm512, %v544, %v546
        %v549 = vsel %vm451, %v541, 0
        %v551 = vsel %vm455, %v547, 0
        %553 = vmatpush.msra.mxu0 0.0
        %554 = vmatpush.msra.mxu0 0.0
        %555 = vmatpush.msra.mxu0 0.0
        %556 = vmatpush.msra.mxu0 0.0
        %557 = vmatpush.msra.mxu0 0.0
        %558 = vmatpush.msra.mxu0 0.0
        %559 = vmatpush.msra.mxu0 0.0
        %560 = vmatpush.msra.mxu0 0.0
        %561 = vmatpush.msra.mxu0 0.0
        %562 = vmatpush.msra.mxu0 0.0
        %563 = vmatpush.msra.mxu0 0.0
        %564 = vmatpush.msra.mxu0 0.0
        %565 = vmatpush.msra.mxu0 0.0
        %566 = vmatpush.msra.mxu0 0.0
        %567 = vmatpush.msra.mxu0 0.0
        %568 = vmatpush.msra.mxu0 %v551
        %569 = vmatmul.f32.gmra.mxu0 %v549
        %v570 = vpop.f32.mrf.mxu0
        %v571 = vadd.f32 0.0, %v570
        %572 = vdwg.mxu0
        %v573 = vadd.f32 %v539, %v571
        %s574 = scalar_lea.vmem %s4, 32
        %v575 = vld [vmem:[%s574] sm:$0xff]
        %576 = vrot.lane.b32.xlu0 %v444, 126
        %v577 = vpop.permute.xlu0 %576
        %578 = vrot.lane.b32.xlu0 %v445, 126
        %v579 = vpop.permute.xlu0 %578
        %vm580 = vcmask 1031168
        %v581 = vsel %vm580, %v577, %v579
        %v583 = vsel %vm451, %v575, 0
        %v585 = vsel %vm455, %v581, 0
        %587 = vmatpush.msra.mxu0 0.0
        %588 = vmatpush.msra.mxu0 0.0
        %589 = vmatpush.msra.mxu0 0.0
        %590 = vmatpush.msra.mxu0 0.0
        %591 = vmatpush.msra.mxu0 0.0
        %592 = vmatpush.msra.mxu0 0.0
        %593 = vmatpush.msra.mxu0 0.0
        %594 = vmatpush.msra.mxu0 0.0
        %595 = vmatpush.msra.mxu0 0.0
        %596 = vmatpush.msra.mxu0 0.0
        %597 = vmatpush.msra.mxu0 0.0
        %598 = vmatpush.msra.mxu0 0.0
        %599 = vmatpush.msra.mxu0 0.0
        %600 = vmatpush.msra.mxu0 0.0
        %601 = vmatpush.msra.mxu0 0.0
        %602 = vmatpush.msra.mxu0 %v585
        %603 = vmatmul.f32.gmra.mxu0 %v583
        %v604 = vpop.f32.mrf.mxu0
        %v605 = vadd.f32 0.0, %v604
        %606 = vdwg.mxu0
        %v607 = vadd.f32 %v573, %v605
        %s608 = scalar_lea.vmem %s4, 40
        %v609 = vld [vmem:[%s608] sm:$0xff]
        %610 = vrot.lane.b32.xlu0 %v446, 126
        %v611 = vpop.permute.xlu0 %610
        %612 = vrot.lane.b32.xlu0 %v447, 126
        %v613 = vpop.permute.xlu0 %612
        %v614 = vsel %vm580, %v611, %v613
        %v616 = vsel %vm451, %v609, 0
        %v618 = vsel %vm455, %v614, 0
        %620 = vmatpush.msra.mxu0 0.0
        %621 = vmatpush.msra.mxu0 0.0
        %622 = vmatpush.msra.mxu0 0.0
        %623 = vmatpush.msra.mxu0 0.0
        %624 = vmatpush.msra.mxu0 0.0
        %625 = vmatpush.msra.mxu0 0.0
        %626 = vmatpush.msra.mxu0 0.0
        %627 = vmatpush.msra.mxu0 0.0
        %628 = vmatpush.msra.mxu0 0.0
        %629 = vmatpush.msra.mxu0 0.0
        %630 = vmatpush.msra.mxu0 0.0
        %631 = vmatpush.msra.mxu0 0.0
        %632 = vmatpush.msra.mxu0 0.0
        %633 = vmatpush.msra.mxu0 0.0
        %634 = vmatpush.msra.mxu0 0.0
        %635 = vmatpush.msra.mxu0 %v618
        %636 = vmatmul.f32.gmra.mxu0 %v616
        %v637 = vpop.f32.mrf.mxu0
        %v638 = vadd.f32 0.0, %v637
        %639 = vdwg.mxu0
        %v640 = vadd.f32 %v607, %v638
        %s641 = scalar_lea.vmem %s4, 48
        %v642 = vld [vmem:[%s641] sm:$0xff]
        %643 = vrot.lane.b32.xlu0 %v444, 125
        %v644 = vpop.permute.xlu0 %643
        %645 = vrot.lane.b32.xlu0 %v445, 125
        %v646 = vpop.permute.xlu0 %645
        %vm647 = vcmask 1022976
        %v648 = vsel %vm647, %v644, %v646
        %v650 = vsel %vm451, %v642, 0
        %v652 = vsel %vm455, %v648, 0
        %654 = vmatpush.msra.mxu0 0.0
        %655 = vmatpush.msra.mxu0 0.0
        %656 = vmatpush.msra.mxu0 0.0
        %657 = vmatpush.msra.mxu0 0.0
        %658 = vmatpush.msra.mxu0 0.0
        %659 = vmatpush.msra.mxu0 0.0
        %660 = vmatpush.msra.mxu0 0.0
        %661 = vmatpush.msra.mxu0 0.0
        %662 = vmatpush.msra.mxu0 0.0
        %663 = vmatpush.msra.mxu0 0.0
        %664 = vmatpush.msra.mxu0 0.0
        %665 = vmatpush.msra.mxu0 0.0
        %666 = vmatpush.msra.mxu0 0.0
        %667 = vmatpush.msra.mxu0 0.0
        %668 = vmatpush.msra.mxu0 0.0
        %669 = vmatpush.msra.mxu0 %v652
        %670 = vmatmul.f32.gmra.mxu0 %v650
        %v671 = vpop.f32.mrf.mxu0
        %v672 = vadd.f32 0.0, %v671
        %673 = vdwg.mxu0
        %v674 = vadd.f32 %v640, %v672
        %s675 = scalar_lea.vmem %s4, 56
        %v676 = vld [vmem:[%s675] sm:$0xff]
        %677 = vrot.lane.b32.xlu0 %v446, 125
        %v678 = vpop.permute.xlu0 %677
        %679 = vrot.lane.b32.xlu0 %v447, 125
        %v680 = vpop.permute.xlu0 %679
        %v681 = vsel %vm647, %v678, %v680
        %v683 = vsel %vm451, %v676, 0
        %v685 = vsel %vm455, %v681, 0
        %687 = vmatpush.msra.mxu0 0.0
        %688 = vmatpush.msra.mxu0 0.0
        %689 = vmatpush.msra.mxu0 0.0
        %690 = vmatpush.msra.mxu0 0.0
        %691 = vmatpush.msra.mxu0 0.0
        %692 = vmatpush.msra.mxu0 0.0
        %693 = vmatpush.msra.mxu0 0.0
        %694 = vmatpush.msra.mxu0 0.0
        %695 = vmatpush.msra.mxu0 0.0
        %696 = vmatpush.msra.mxu0 0.0
        %697 = vmatpush.msra.mxu0 0.0
        %698 = vmatpush.msra.mxu0 0.0
        %699 = vmatpush.msra.mxu0 0.0
        %700 = vmatpush.msra.mxu0 0.0
        %701 = vmatpush.msra.mxu0 0.0
        %702 = vmatpush.msra.mxu0 %v685
        %703 = vmatmul.f32.gmra.mxu0 %v683
        %v704 = vpop.f32.mrf.mxu0
        %v705 = vadd.f32 0.0, %v704
        %706 = vdwg.mxu0
        %v707 = vadd.f32 %v674, %v705
        %s708 = scalar_lea.vmem %s4, 64
        %v709 = vld [vmem:[%s708] sm:$0xff]
        %710 = vrot.lane.b32.xlu0 %v444, 124
        %v711 = vpop.permute.xlu0 %710
        %712 = vrot.lane.b32.xlu0 %v445, 124
        %v713 = vpop.permute.xlu0 %712
        %vm714 = vcmask 1014784
        %v715 = vsel %vm714, %v711, %v713
        %v717 = vsel %vm451, %v709, 0
        %v719 = vsel %vm455, %v715, 0
        %721 = vmatpush.msra.mxu0 0.0
        %722 = vmatpush.msra.mxu0 0.0
        %723 = vmatpush.msra.mxu0 0.0
        %724 = vmatpush.msra.mxu0 0.0
        %725 = vmatpush.msra.mxu0 0.0
        %726 = vmatpush.msra.mxu0 0.0
        %727 = vmatpush.msra.mxu0 0.0
        %728 = vmatpush.msra.mxu0 0.0
        %729 = vmatpush.msra.mxu0 0.0
        %730 = vmatpush.msra.mxu0 0.0
        %731 = vmatpush.msra.mxu0 0.0
        %732 = vmatpush.msra.mxu0 0.0
        %733 = vmatpush.msra.mxu0 0.0
        %734 = vmatpush.msra.mxu0 0.0
        %735 = vmatpush.msra.mxu0 0.0
        %736 = vmatpush.msra.mxu0 %v719
        %737 = vmatmul.f32.gmra.mxu0 %v717
        %v738 = vpop.f32.mrf.mxu0
        %v739 = vadd.f32 0.0, %v738
        %740 = vdwg.mxu0
        %v741 = vadd.f32 %v707, %v739
        %s742 = scalar_lea.vmem %s4, 72
        %v743 = vld [vmem:[%s742] sm:$0xff]
        %744 = vrot.lane.b32.xlu0 %v446, 124
        %v745 = vpop.permute.xlu0 %744
        %746 = vrot.lane.b32.xlu0 %v447, 124
        %v747 = vpop.permute.xlu0 %746
        %v748 = vsel %vm714, %v745, %v747
        %v750 = vsel %vm451, %v743, 0
        %v752 = vsel %vm455, %v748, 0
        %754 = vmatpush.msra.mxu0 0.0
        %755 = vmatpush.msra.mxu0 0.0
        %756 = vmatpush.msra.mxu0 0.0
        %757 = vmatpush.msra.mxu0 0.0
        %758 = vmatpush.msra.mxu0 0.0
        %759 = vmatpush.msra.mxu0 0.0
        %760 = vmatpush.msra.mxu0 0.0
        %761 = vmatpush.msra.mxu0 0.0
        %762 = vmatpush.msra.mxu0 0.0
        %763 = vmatpush.msra.mxu0 0.0
        %764 = vmatpush.msra.mxu0 0.0
        %765 = vmatpush.msra.mxu0 0.0
        %766 = vmatpush.msra.mxu0 0.0
        %767 = vmatpush.msra.mxu0 0.0
        %768 = vmatpush.msra.mxu0 0.0
        %769 = vmatpush.msra.mxu0 %v752
        %770 = vmatmul.f32.gmra.mxu0 %v750
        %v771 = vpop.f32.mrf.mxu0
        %v772 = vadd.f32 0.0, %v771
        %773 = vdwg.mxu0
        %v774 = vadd.f32 %v741, %v772
        %s775 = scalar_lea.vmem %s4, 80
        %v776 = vld [vmem:[%s775] sm:$0xff]
        %777 = vrot.lane.b32.xlu0 %v444, 123
        %v778 = vpop.permute.xlu0 %777
        %779 = vrot.lane.b32.xlu0 %v445, 123
        %v780 = vpop.permute.xlu0 %779
        %vm781 = vcmask 1006592
        %v782 = vsel %vm781, %v778, %v780
        %v784 = vsel %vm451, %v776, 0
        %v786 = vsel %vm455, %v782, 0
        %788 = vmatpush.msra.mxu0 0.0
        %789 = vmatpush.msra.mxu0 0.0
        %790 = vmatpush.msra.mxu0 0.0
        %791 = vmatpush.msra.mxu0 0.0
        %792 = vmatpush.msra.mxu0 0.0
        %793 = vmatpush.msra.mxu0 0.0
        %794 = vmatpush.msra.mxu0 0.0
        %795 = vmatpush.msra.mxu0 0.0
        %796 = vmatpush.msra.mxu0 0.0
        %797 = vmatpush.msra.mxu0 0.0
        %798 = vmatpush.msra.mxu0 0.0
        %799 = vmatpush.msra.mxu0 0.0
        %800 = vmatpush.msra.mxu0 0.0
        %801 = vmatpush.msra.mxu0 0.0
        %802 = vmatpush.msra.mxu0 0.0
        %803 = vmatpush.msra.mxu0 %v786
        %804 = vmatmul.f32.gmra.mxu0 %v784
        %v805 = vpop.f32.mrf.mxu0
        %v806 = vadd.f32 0.0, %v805
        %807 = vdwg.mxu0
        %v808 = vadd.f32 %v774, %v806
        %s809 = scalar_lea.vmem %s4, 88
        %v810 = vld [vmem:[%s809] sm:$0xff]
        %811 = vrot.lane.b32.xlu0 %v446, 123
        %v812 = vpop.permute.xlu0 %811
        %813 = vrot.lane.b32.xlu0 %v447, 123
        %v814 = vpop.permute.xlu0 %813
        %v815 = vsel %vm781, %v812, %v814
        %v817 = vsel %vm451, %v810, 0
        %v819 = vsel %vm455, %v815, 0
        %821 = vmatpush.msra.mxu0 0.0
        %822 = vmatpush.msra.mxu0 0.0
        %823 = vmatpush.msra.mxu0 0.0
        %824 = vmatpush.msra.mxu0 0.0
        %825 = vmatpush.msra.mxu0 0.0
        %826 = vmatpush.msra.mxu0 0.0
        %827 = vmatpush.msra.mxu0 0.0
        %828 = vmatpush.msra.mxu0 0.0
        %829 = vmatpush.msra.mxu0 0.0
        %830 = vmatpush.msra.mxu0 0.0
        %831 = vmatpush.msra.mxu0 0.0
        %832 = vmatpush.msra.mxu0 0.0
        %833 = vmatpush.msra.mxu0 0.0
        %834 = vmatpush.msra.mxu0 0.0
        %835 = vmatpush.msra.mxu0 0.0
        %836 = vmatpush.msra.mxu0 %v819
        %837 = vmatmul.f32.gmra.mxu0 %v817
        %v838 = vpop.f32.mrf.mxu0
        %v839 = vadd.f32 0.0, %v838
        %840 = vdwg.mxu0
        %v841 = vadd.f32 %v808, %v839
        %s842 = scalar_lea.vmem %s4, 96
        %v843 = vld [vmem:[%s842] sm:$0xff]
        %844 = vrot.lane.b32.xlu0 %v444, 122
        %v845 = vpop.permute.xlu0 %844
        %846 = vrot.lane.b32.xlu0 %v445, 122
        %v847 = vpop.permute.xlu0 %846
        %vm848 = vcmask 998400
        %v849 = vsel %vm848, %v845, %v847
        %v851 = vsel %vm451, %v843, 0
        %v853 = vsel %vm455, %v849, 0
        %855 = vmatpush.msra.mxu0 0.0
        %856 = vmatpush.msra.mxu0 0.0
        %857 = vmatpush.msra.mxu0 0.0
        %858 = vmatpush.msra.mxu0 0.0
        %859 = vmatpush.msra.mxu0 0.0
        %860 = vmatpush.msra.mxu0 0.0
        %861 = vmatpush.msra.mxu0 0.0
        %862 = vmatpush.msra.mxu0 0.0
        %863 = vmatpush.msra.mxu0 0.0
        %864 = vmatpush.msra.mxu0 0.0
        %865 = vmatpush.msra.mxu0 0.0
        %866 = vmatpush.msra.mxu0 0.0
        %867 = vmatpush.msra.mxu0 0.0
        %868 = vmatpush.msra.mxu0 0.0
        %869 = vmatpush.msra.mxu0 0.0
        %870 = vmatpush.msra.mxu0 %v853
        %871 = vmatmul.f32.gmra.mxu0 %v851
        %v872 = vpop.f32.mrf.mxu0
        %v873 = vadd.f32 0.0, %v872
        %874 = vdwg.mxu0
        %v875 = vadd.f32 %v841, %v873
        %s876 = scalar_lea.vmem %s4, 104
        %v877 = vld [vmem:[%s876] sm:$0xff]
        %878 = vrot.lane.b32.xlu0 %v446, 122
        %v879 = vpop.permute.xlu0 %878
        %880 = vrot.lane.b32.xlu0 %v447, 122
        %v881 = vpop.permute.xlu0 %880
        %v882 = vsel %vm848, %v879, %v881
        %v884 = vsel %vm451, %v877, 0
        %v886 = vsel %vm455, %v882, 0
        %888 = vmatpush.msra.mxu0 0.0
        %889 = vmatpush.msra.mxu0 0.0
        %890 = vmatpush.msra.mxu0 0.0
        %891 = vmatpush.msra.mxu0 0.0
        %892 = vmatpush.msra.mxu0 0.0
        %893 = vmatpush.msra.mxu0 0.0
        %894 = vmatpush.msra.mxu0 0.0
        %895 = vmatpush.msra.mxu0 0.0
        %896 = vmatpush.msra.mxu0 0.0
        %897 = vmatpush.msra.mxu0 0.0
        %898 = vmatpush.msra.mxu0 0.0
        %899 = vmatpush.msra.mxu0 0.0
        %900 = vmatpush.msra.mxu0 0.0
        %901 = vmatpush.msra.mxu0 0.0
        %902 = vmatpush.msra.mxu0 0.0
        %903 = vmatpush.msra.mxu0 %v886
        %904 = vmatmul.f32.gmra.mxu0 %v884
        %v905 = vpop.f32.mrf.mxu0
        %v906 = vadd.f32 0.0, %v905
        %907 = vdwg.mxu0
        %v908 = vadd.f32 %v875, %v906
        %s909 = scalar_lea.vmem %s4, 112
        %v910 = vld [vmem:[%s909] sm:$0xff]
        %911 = vrot.lane.b32.xlu0 %v444, 121
        %v912 = vpop.permute.xlu0 %911
        %913 = vrot.lane.b32.xlu0 %v445, 121
        %v914 = vpop.permute.xlu0 %913
        %vm915 = vcmask 990208
        %v916 = vsel %vm915, %v912, %v914
        %v918 = vsel %vm451, %v910, 0
        %v920 = vsel %vm455, %v916, 0
        %922 = vmatpush.msra.mxu0 0.0
        %923 = vmatpush.msra.mxu0 0.0
        %924 = vmatpush.msra.mxu0 0.0
        %925 = vmatpush.msra.mxu0 0.0
        %926 = vmatpush.msra.mxu0 0.0
        %927 = vmatpush.msra.mxu0 0.0
        %928 = vmatpush.msra.mxu0 0.0
        %929 = vmatpush.msra.mxu0 0.0
        %930 = vmatpush.msra.mxu0 0.0
        %931 = vmatpush.msra.mxu0 0.0
        %932 = vmatpush.msra.mxu0 0.0
        %933 = vmatpush.msra.mxu0 0.0
        %934 = vmatpush.msra.mxu0 0.0
        %935 = vmatpush.msra.mxu0 0.0
        %936 = vmatpush.msra.mxu0 0.0
        %937 = vmatpush.msra.mxu0 %v920
        %938 = vmatmul.f32.gmra.mxu0 %v918
        %v939 = vpop.f32.mrf.mxu0
        %v940 = vadd.f32 0.0, %v939
        %941 = vdwg.mxu0
        %v942 = vadd.f32 %v908, %v940
        %s943 = sld [smem:[#allocation2]]
        %v944 = vld [vmem:[%s6] sm:$0xff]
        %946 = vset.pattern.permute.xlu0 0
        %947 = vperm.xlu0 %946, %v944
        %v948 = vpop.permute.xlu0 %947
        %v950 = vadd.f32 %v942, %v948
        %vm951 = vcmp.gt.f32.partialorder %v950, 0.0
        %v952 = vstv %s943
        %v953 = vmul.f32 %v952, %v950
        %v954 = vsel %vm951, %v950, %v953
        %v955 = vld [vmem:[%s5] sm:$0xff]
        %v956 = vld [vmem:[%s7] sm:$0xff]
        %958 = vset.pattern.permute.xlu0 0
        %959 = vperm.xlu0 %958, %v956
        %v960 = vpop.permute.xlu0 %959
        %v963 = vsel %vm451, %v955, 0
        %965 = vmatpush.msra.mxu0 0.0
        %966 = vmatpush.msra.mxu0 0.0
        %967 = vmatpush.msra.mxu0 0.0
        %968 = vmatpush.msra.mxu0 0.0
        %969 = vmatpush.msra.mxu0 0.0
        %970 = vmatpush.msra.mxu0 0.0
        %971 = vmatpush.msra.mxu0 0.0
        %972 = vmatpush.msra.mxu0 0.0
        %973 = vmatpush.msra.mxu0 0.0
        %974 = vmatpush.msra.mxu0 0.0
        %975 = vmatpush.msra.mxu0 0.0
        %976 = vmatpush.msra.mxu0 0.0
        %977 = vmatpush.msra.mxu0 0.0
        %978 = vmatpush.msra.mxu0 0.0
        %979 = vmatpush.msra.mxu0 0.0
        %980 = vmatpush.msra.mxu0 %v685
        %981 = vmatmul.f32.gmra.mxu0 %v963
        %v982 = vpop.f32.mrf.mxu0
        %v983 = vadd.f32 %v960, %v982
        %984 = vdwg.mxu0
        %v985 = vadd.f32 %v954, %v983
        %986 = vst [vmem:[%s413] sm:$0xff] %v985
        %s987 = sand.u32 %s263, 1
        %s988 = scalar_lea.sflag [#allocation4], %s987
        %s989 = sand.u32 %s263, 1
        %s990 = smul.addr %s989, 8
        %s991 = scalar_lea.vmem [#allocation3], %s990
        // Predicated region
        $region57: #{tpu_custom_call.1} parent=55 // pred_check
          %p992 = pneg %p273
        $region58: #{tpu_custom_call.1} parent=55 // pred_check_branch
          %994 = sbr.rel (%p992) target = $region60
        $region59: #{tpu_custom_call.1} parent=55 // pred_region
          %996 = vsyncadd %s988, 0
          %s997 = sadd.s32 %s29, %s28
          %s998 = smul.addr %s997, 8
          %s999 = scalar_lea.hbm %s9, %s998
          %s1001 = sshll.u32 %s991, 4
          %s1002 = int_to_ptr.vmem [resolvable:$true] %s1001
          %s1003 = sshll.u32 %s999, 4
          %s1004 = int_to_ptr.hbm [resolvable:$true] %s1003
          %1006 = dma.vmem_to_hbm [thread:$0]  %s1002, 128, %s1004, %s988
        $region60: #{tpu_custom_call.1} parent=55 // pred_fallthru
          _
      $region56: #{tpu_custom_call.1} parent=5 // pred_fallthru
        _
      %p1007 = scmp.le.s32.totalorder 2, %s19
      // Predicated region
      $region61: #{tpu_custom_call.1} parent=5 // pred_check
        %p1008 = pneg %p1007
      $region62: #{tpu_custom_call.1} parent=5 // pred_check_branch
        %1010 = sbr.rel (%p1008) target = $region64
      $region63: #{tpu_custom_call.1} parent=5 // pred_region
        %s1011 = ssub.s32 %s19, 2
        // Predicated region
        $region65: #{tpu_custom_call.1} parent=63 // pred_check
          %p1012 = pneg %p279
        $region66: #{tpu_custom_call.1} parent=63 // pred_check_branch
          %1014 = sbr.rel (%p1012) target = $region68
        $region67: #{tpu_custom_call.1} parent=63 // pred_region
          %s1015 = sand.u32 %s264, 1
          %s1016 = scalar_lea.sflag [#allocation4], %s1015
          %s1017 = sand.u32 %s264, 1
          %s1018 = smul.addr %s1017, 8
          %s1019 = scalar_lea.vmem [#allocation3], %s1018
          %1021 = dma.done %s1016, 128
        $region68: #{tpu_custom_call.1} parent=63 // pred_fallthru
          _
      $region64: #{tpu_custom_call.1} parent=5 // pred_fallthru
        _
    $region6: #{tpu_custom_call.1} parent=1 // loop_footer
      %s23 = sadd.s32 1, %s19
    $region7: #{tpu_custom_call.1} parent=1 // loop_footer_branch
      %18 = sbr.rel target = $region3
    $region8: #{tpu_custom_call.1} parent=1 // loop_exit
      _
    %1022 = vsyncpa [#allocation4], 1
    %s1023 = scalar_lea.sflag [#allocation4], 1
    %1024 = vsyncpa %s1023, 1

</llo_original>
